<compile_context>
chip_gen: v7x
topology: tpu7x:2x2x1
jax: 0.10.0
libtpu: 0.0.40
codegen_flags: <defaults>
</compile_context>

<pallas_src>
import jax
import jax.numpy as jnp
from jax.experimental import pallas as pl
from jax.experimental.pallas import tpu as pltpu


_LANES = 128                    # vreg lane width (v5e/v6e/v7x)
_TARGET_TILE_BYTES = 1 << 20    # ~1 MiB per tile; in+out double-buffered = ~4 MiB,
                                # comfortably under v7x's 32 MiB scoped VMEM default.
_MIN_PALLAS_ELEMS = 1 << 14     # below this, launch overhead dominates -> return x.


def _sublanes_for(dtype) -> int:
    """Packed-sublane tile height for a dtype: 8 (f32), 16 (bf16), 32 (int8/fp8)."""
    itemsize = jnp.dtype(dtype).itemsize
    return 8 * max(1, 4 // itemsize)


# ----------------------------------------------------------------------------
# Path A: whole-array HBM->HBM DMA (no VMEM staging, no padding, any shape).
# ----------------------------------------------------------------------------
def _dma_copy_kernel(x_hbm, o_hbm, sem):
    cp = pltpu.make_async_copy(x_hbm, o_hbm, sem)
    cp.start()
    cp.wait()


def _dma_copy(x: jax.Array) -> jax.Array:
    nbytes = x.size * jnp.dtype(x.dtype).itemsize
    return pl.pallas_call(
        _dma_copy_kernel,
        out_shape=jax.ShapeDtypeStruct(x.shape, x.dtype),
        in_specs=[pl.BlockSpec(memory_space=pl.ANY)],
        out_specs=pl.BlockSpec(memory_space=pl.ANY),
        scratch_shapes=[pltpu.SemaphoreType.DMA],
        cost_estimate=pl.CostEstimate(
            flops=0, transcendentals=0, bytes_accessed=2 * nbytes),
    )(x)


# ----------------------------------------------------------------------------
# Path B: lane-dense tiled copy (wide rows, ~1 MiB tiles, parallel grid).
# ----------------------------------------------------------------------------
def _copy_kernel(x_ref, o_ref):
    o_ref[...] = x_ref[...]


def _tiled_copy(x2d: jax.Array, block_rows: int) -> jax.Array:
    rows, cols = x2d.shape
    nbytes = x2d.size * jnp.dtype(x2d.dtype).itemsize
    grid = (pl.cdiv(rows, block_rows),)  # partial last tile handled by Pallas
    return pl.pallas_call(
        _copy_kernel,
        out_shape=jax.ShapeDtypeStruct((rows, cols), x2d.dtype),
        grid=grid,
        in_specs=[pl.BlockSpec((block_rows, cols), lambda i: (i, 0))],
        out_specs=pl.BlockSpec((block_rows, cols), lambda i: (i, 0)),
        compiler_params=pltpu.CompilerParams(
            dimension_semantics=("parallel",)),
        cost_estimate=pl.CostEstimate(
            flops=0, transcendentals=0, bytes_accessed=2 * nbytes),
    )(x2d)


def _pallas_identity(x: jax.Array, force_pallas: bool = False) -> jax.Array:
    """Identity copy of `x` through a Pallas kernel (smoke-test only)."""
    n = x.size
    if n == 0:
        return x
    if not force_pallas and n < _MIN_PALLAS_ELEMS:
        # Tiny input: a pure identity needs no copy; avoid launch overhead.
        return x

    itemsize = jnp.dtype(x.dtype).itemsize
    sub = _sublanes_for(x.dtype)

    # Prefer a lane-dense 2-D view (rows, k*128) with sublane-aligned rows.
    # Widest lanes first: longer unmasked vst + longer HBM DMA bursts.
    for k in (16, 8, 4, 2, 1):
        cols = _LANES * k
        if n % (cols * sub) != 0:
            continue
        rows = n // cols
        x2d = x.reshape(rows, cols)  # contiguous reshape -> metadata only

        # ~1 MiB per tile, rounded to the packed sublane height.
        block_rows = (_TARGET_TILE_BYTES // (cols * itemsize)) // sub * sub
        block_rows = max(sub, min(block_rows, rows))
        # Prefer >= 2 grid steps so v7x's two TensorCores can both be used.
        if -(-rows // block_rows) == 1 and rows >= 2 * sub:
            block_rows = (((rows + 1) // 2) + sub - 1) // sub * sub

        y2d = _tiled_copy(x2d, block_rows)
        return y2d.reshape(x.shape)

    # Shape doesn't factor cleanly: single HBM->HBM DMA, no padding, no VMEM.
    return _dma_copy(x)


# ----------------------------------------------------------------------------
# Module-equivalent forward.
# ----------------------------------------------------------------------------
def transformer_block_forward(x: jax.Array):
    """Faithful equivalent of transformer_block.forward(X).

    The PyTorch forward ignores X and returns None; accordingly this does no
    work at all.
    """
    # TODO(synk): the reference forward() is an empty stub; there is no
    # attention / FFN math in the module to translate into Pallas kernels.
    del x
    return None


if __name__ == "__main__":
    key = jax.random.PRNGKey(0)
    k1, k2 = jax.random.split(key)

    # Small time-series-style input: (batch=2, seq=8, hidden=32).
    x_small = jax.random.normal(k1, (2, 8, 32), dtype=jnp.float32)

    # 1) Module-equivalent forward: must return None, like the PyTorch stub.
    out = transformer_block_forward(x_small)
    assert out is None

    # 2) Standalone Pallas smoke tests (not part of the forward path).
    #    a) tiny input takes the no-copy fast path.
    y0 = _pallas_identity(x_small)
    jax.block_until_ready(y0)
    assert y0.shape == x_small.shape and y0.dtype == x_small.dtype
    assert bool(jnp.allclose(y0, x_small))

    #    b) tiny input forced through the whole-array HBM->HBM DMA kernel.
    y1 = _pallas_identity(x_small, force_pallas=True)
    jax.block_until_ready(y1)
    assert y1.shape == x_small.shape and y1.dtype == x_small.dtype
    assert bool(jnp.allclose(y1, x_small))

    #    c) lane-dense tiled copy path (flat size factors into (rows, k*128)).
    x_big = jax.random.normal(k2, (8, 128, 128), dtype=jnp.float32)  # 512 KiB
    y2 = _pallas_identity(x_big, force_pallas=True)
    jax.block_until_ready(y2)
    assert y2.shape == x_big.shape and y2.dtype == x_big.dtype
    assert bool(jnp.allclose(y2, x_big))

    print("KERNEL_OK")
</pallas_src>

<mosaic_0001>
module attributes {stable_mosaic.version = 11 : i64} {
  func.func @_dma_copy_kernel(%arg0: memref<2x8x32xf32, #tpu.memory_space<any>>, %arg1: memref<2x8x32xf32, #tpu.memory_space<any>>, %arg2: memref<!tpu.dma_semaphore, #tpu.memory_space<semaphore_mem>>) attributes {dimension_semantics = [], scalar_prefetch = 0 : i64, scratch_operands = 1 : i64, tpu.core_type = #tpu.core_type<tc>} {
    tpu.enqueue_dma source(%arg0 : memref<2x8x32xf32, #tpu.memory_space<any>>) target(%arg1 : memref<2x8x32xf32, #tpu.memory_space<any>>) target_semaphore(%arg2 : memref<!tpu.dma_semaphore, #tpu.memory_space<semaphore_mem>>)
    tpu.wait_dma2 semaphore(%arg2 : memref<!tpu.dma_semaphore, #tpu.memory_space<semaphore_mem>>) src(%arg0 : memref<2x8x32xf32, #tpu.memory_space<any>>) dst(%arg1 : memref<2x8x32xf32, #tpu.memory_space<any>>)
    return
  }
}

</mosaic_0001>

<llo_original>
// kernel: tpu_custom_call.1
$region0: #{tpu_custom_call.1}
  #allocation0 [shape = 'u32[]', space=smem, size = 0x4, offset = 0x4, fixed_abs, tag = 'smem constant byte address 0x4 - core index']
  #allocation1 [shape = 'u32[144,128]{1,0:T(1,128)}', space=vmem, size = 0x12000, scoped, tag = 'internal scratch']
  #allocation2 [shape = 's32[1]{0}', space=sflag, size = 0x4, scoped, tag = 'scratch operand']
  #allocation3 [shape = 's32[]', space=sflag, size = 0x4, offset = 0, fixed_abs, tag = 'sflag constant byte address 0x0 - dummy sync flag']
  #allocation4 [shape = 'u32[0]{0}', space=smem, size = 0, offset = 0, fixed_abs, tag = 'smem constant byte address 0x0 - null']
  %s0 = inlined_call_operand.hbm [shape: f32[2,8,32], index: 0, kind: input, shape index: {}]
  %s1 = inlined_call_operand.hbm [shape: f32[2,8,32], index: 1, kind: output, shape index: {}]
  %s2 = sld [smem:[#allocation0]]
  $region2: #{tpu_custom_call.1} parent=0
    _
  %s4 = ssub.s32 1, %s2
  %s5 = scalar_select 0, %s4, %s2
  %s7 = sshll.u32 1, 14
  %s8 = sxor.u32 4294967295, %s7
  %s11 = sshll.u32 3, 24
  %s12 = sxor.u32 4294967295, %s11
  %s13 = sand.u32 0, %s12
  %s15 = sor.u32 %s13, 0
  %18 = dma.general %s0, 256, %s1, [#allocation2], [#allocation3], [#allocation4], %s15, 0
  %s19 = smul.u32 2, 8
  %s20 = smul.u32 %s19, 1
  %s21 = sshll.u32 %s20, 4
  %22 = dma.done [#allocation2], %s21
  %23 = vsyncmov [#allocation2]
  %s24 = vpop.sfrf %23
  %p25 = scmp.eq.s32.totalorder %s24, 0
  %p26 = pneg %p25
  %28 = shalt.err (%p26)

</llo_original>
